<compile_context>
chip_gen: v6e
topology: v6e:2x2x1
jax: 0.10.0
libtpu: 0.0.40
codegen_flags: <defaults>
</compile_context>

<pallas_src>
import functools

import jax
import jax.numpy as jnp
from jax.experimental import pallas as pl
from jax.experimental.pallas import tpu as pltpu  # noqa: F401  (TPU backend)

BN_EPS = 1e-5


def _softplus(x):
    # Numerically stable softplus; equal to torch.nn.functional.softplus
    # (beta=1, threshold=20) to within f32 precision for all x.
    return jnp.maximum(x, 0.0) + jnp.log1p(jnp.exp(-jnp.abs(x)))


def _encoder_kernel(x_ref, w_in_ref, b_in_ref,
                    w_h_ref, b_h_ref, gamma_ref, beta_ref,
                    w_mu_ref, b_mu_ref, w_sig_ref, b_sig_ref,
                    mu_ref, sigma_ref):
    # Matmul operand dtype (f32 by default, bf16 if the wrapper casts weights).
    mm_dtype = w_h_ref.dtype

    x = x_ref[...]

    # --- layer_in + softplus (f32 accumulate) ---
    h = jnp.dot(x, w_in_ref[...], preferred_element_type=jnp.float32) + b_in_ref[...]
    h = _softplus(h)

    # --- layer_hidden: Linear -> BatchNorm1d (training-mode batch stats) -> Softplus ---
    h = jnp.dot(h.astype(mm_dtype), w_h_ref[...],
                preferred_element_type=jnp.float32) + b_h_ref[...]
    # One-pass biased variance: E[h^2] - E[h]^2 (clamped against cancellation).
    mean = jnp.mean(h, axis=0, keepdims=True)
    mean_sq = jnp.mean(h * h, axis=0, keepdims=True)
    var = jnp.maximum(mean_sq - mean * mean, 0.0)
    h = (h - mean) * jax.lax.rsqrt(var + BN_EPS)
    h = h * gamma_ref[...] + beta_ref[...]
    h = _softplus(h)

    # --- extra softplus applied in forward() ---
    h = _softplus(h)

    # --- layer_out, split into lane-contiguous mu / sigma halves ---
    h = h.astype(mm_dtype)
    mu_ref[...] = (jnp.dot(h, w_mu_ref[...], preferred_element_type=jnp.float32)
                   + b_mu_ref[...])
    sigma_ref[...] = jnp.exp(
        jnp.dot(h, w_sig_ref[...], preferred_element_type=jnp.float32)
        + b_sig_ref[...])


def diagonal_gaussian_encoder(x, params, output_size, *, matmul_dtype=None):
    """x: (B, input_size) float32; params: dict of weights; returns (mu, sigma).

    matmul_dtype: optionally cast x and the weight matrices (not biases / BN
    affine params) to e.g. jnp.bfloat16 for MXU throughput on v6e/v7x; all
    accumulation, BatchNorm statistics and elementwise math stay f32.
    """
    B = x.shape[0]

    # Split the output projection into mu / sigma halves in the wrapper so the
    # kernel writes two lane-dense slabs instead of slicing at a lane offset.
    w_out, b_out = params["w_out"], params["b_out"]
    w_mu, w_sig = w_out[:, :output_size], w_out[:, output_size:]
    b_mu, b_sig = b_out[:, :output_size], b_out[:, output_size:]

    w_in, w_h, x_mm = params["w_in"], params["w_h"], x
    if matmul_dtype is not None:
        x_mm = x.astype(matmul_dtype)
        w_in = w_in.astype(matmul_dtype)
        w_h = w_h.astype(matmul_dtype)
        w_mu = w_mu.astype(matmul_dtype)
        w_sig = w_sig.astype(matmul_dtype)

    args = (
        x_mm,
        w_in, params["b_in"],
        w_h, params["b_h"],
        params["gamma"], params["beta"],
        w_mu, b_mu, w_sig, b_sig,
    )

    # Single grid point: every operand lives fully in VMEM (a few KiB total).
    # Default-arg capture avoids the late-binding-closure pitfall.
    in_specs = [
        pl.BlockSpec(a.shape, lambda *_, n=a.ndim: (0,) * n)
        for a in args
    ]
    out_specs = [
        pl.BlockSpec((B, output_size), lambda: (0, 0)),
        pl.BlockSpec((B, output_size), lambda: (0, 0)),
    ]

    mu, sigma = pl.pallas_call(
        _encoder_kernel,
        grid=(),
        in_specs=in_specs,
        out_specs=out_specs,
        out_shape=(
            jax.ShapeDtypeStruct((B, output_size), jnp.float32),
            jax.ShapeDtypeStruct((B, output_size), jnp.float32),
        ),
    )(*args)
    return mu, sigma


def _xavier_uniform(key, fan_in, fan_out):
    # matches torch.nn.init.xavier_uniform_ on a (fan_out, fan_in) weight,
    # stored here transposed as (fan_in, fan_out) for the kernel's x @ W layout.
    bound = (6.0 / (fan_in + fan_out)) ** 0.5
    return jax.random.uniform(key, (fan_in, fan_out), jnp.float32, -bound, bound)


def init_params(key, input_size, hidden_sizes, output_size):
    k = jax.random.split(key, 8)
    h0, h1 = hidden_sizes
    params = {
        "w_in": _xavier_uniform(k[0], input_size, h0),
        "b_in": (0.001 * jax.random.normal(k[1], (1, h0))).astype(jnp.float32),
        "w_h": _xavier_uniform(k[2], h0, h1),
        "b_h": (0.001 * jax.random.normal(k[3], (1, h1))).astype(jnp.float32),
        # BatchNorm1d affine params (PyTorch init: weight=1, bias=0)
        "gamma": jnp.ones((1, h1), jnp.float32),
        "beta": jnp.zeros((1, h1), jnp.float32),
        "w_out": _xavier_uniform(k[4], h1, 2 * output_size),
        "b_out": (0.001 * jax.random.normal(k[5], (1, 2 * output_size))).astype(jnp.float32),
    }
    return params


def _reference(x, params, output_size):
    """Pure-JAX reference matching the PyTorch forward (training mode)."""
    h = jax.nn.softplus(x @ params["w_in"] + params["b_in"])
    h = h @ params["w_h"] + params["b_h"]
    mean = jnp.mean(h, axis=0, keepdims=True)
    var = jnp.mean((h - mean) ** 2, axis=0, keepdims=True)  # biased variance
    h = (h - mean) / jnp.sqrt(var + BN_EPS)
    h = h * params["gamma"] + params["beta"]
    h = jax.nn.softplus(jax.nn.softplus(h))
    o = h @ params["w_out"] + params["b_out"]
    return o[:, :output_size], jnp.exp(o[:, output_size:])


if __name__ == "__main__":
    key = jax.random.PRNGKey(0)
    k_x, k_p = jax.random.split(key)

    batch = 8
    input_size = 16
    hidden_sizes = [32, 32]
    output_size = 8

    x = jax.random.normal(k_x, (batch, input_size), jnp.float32)
    params = init_params(k_p, input_size, hidden_sizes, output_size)

    mu, sigma = diagonal_gaussian_encoder(x, params, output_size)
    jax.block_until_ready((mu, sigma))

    mu_ref, sigma_ref = _reference(x, params, output_size)

    assert mu.shape == (batch, output_size)
    assert sigma.shape == (batch, output_size)
    assert bool(jnp.all(sigma > 0.0))
    assert bool(jnp.allclose(mu, mu_ref, atol=1e-5, rtol=1e-5))
    assert bool(jnp.allclose(sigma, sigma_ref, atol=1e-5, rtol=1e-5))
    print("KERNEL_OK")
</pallas_src>

<mosaic_0001>
module attributes {stable_mosaic.version = 11 : i64} {
  func.func @_encoder_kernel(%arg0: memref<8x16xf32, #tpu.memory_space<vmem>>, %arg1: memref<16x32xf32, #tpu.memory_space<vmem>>, %arg2: memref<1x32xf32, #tpu.memory_space<vmem>>, %arg3: memref<32x32xf32, #tpu.memory_space<vmem>>, %arg4: memref<1x32xf32, #tpu.memory_space<vmem>>, %arg5: memref<1x32xf32, #tpu.memory_space<vmem>>, %arg6: memref<1x32xf32, #tpu.memory_space<vmem>>, %arg7: memref<32x8xf32, #tpu.memory_space<vmem>>, %arg8: memref<1x8xf32, #tpu.memory_space<vmem>>, %arg9: memref<32x8xf32, #tpu.memory_space<vmem>>, %arg10: memref<1x8xf32, #tpu.memory_space<vmem>>, %arg11: memref<8x8xf32, #tpu.memory_space<vmem>>, %arg12: memref<8x8xf32, #tpu.memory_space<vmem>>) attributes {dimension_semantics = [], scalar_prefetch = 0 : i64, scratch_operands = 0 : i64, tpu.core_type = #tpu.core_type<tc>} {
    %c0 = arith.constant 0 : index
    %c0_0 = arith.constant 0 : index
    %0 = vector.load %arg0[%c0, %c0_0] : memref<8x16xf32, #tpu.memory_space<vmem>>, vector<8x16xf32>
    %c0_1 = arith.constant 0 : index
    %c0_2 = arith.constant 0 : index
    %1 = vector.load %arg1[%c0_1, %c0_2] : memref<16x32xf32, #tpu.memory_space<vmem>>, vector<16x32xf32>
    %cst = arith.constant dense<0.000000e+00> : vector<8x32xf32>
    %2 = tpu.matmul %0, %1, %cst {dimension_numbers = #tpu.dot_dimension_numbers<[1], [0], [0], [1], [0, 0, 1, 1], [], []>} : vector<8x16xf32>, vector<16x32xf32>, vector<8x32xf32> -> vector<8x32xf32>
    %c0_3 = arith.constant 0 : index
    %c0_4 = arith.constant 0 : index
    %3 = vector.load %arg2[%c0_3, %c0_4] : memref<1x32xf32, #tpu.memory_space<vmem>>, vector<1x32xf32>
    %4 = vector.broadcast %3 : vector<1x32xf32> to vector<8x32xf32>
    %5 = arith.addf %2, %4 : vector<8x32xf32>
    %cst_5 = arith.constant 0.000000e+00 : f32
    %6 = vector.broadcast %cst_5 : f32 to vector<8x32xf32>
    %7 = arith.maximumf %5, %6 : vector<8x32xf32>
    %8 = math.absf %5 : vector<8x32xf32>
    %cst_6 = arith.constant 0.000000e+00 : f32
    %9 = vector.broadcast %cst_6 : f32 to vector<8x32xf32>
    %10 = arith.subf %9, %8 : vector<8x32xf32>
    %11 = math.exp %10 : vector<8x32xf32>
    %12 = math.log1p %11 : vector<8x32xf32>
    %13 = arith.addf %7, %12 : vector<8x32xf32>
    %c0_7 = arith.constant 0 : index
    %c0_8 = arith.constant 0 : index
    %14 = vector.load %arg3[%c0_7, %c0_8] : memref<32x32xf32, #tpu.memory_space<vmem>>, vector<32x32xf32>
    %cst_9 = arith.constant dense<0.000000e+00> : vector<8x32xf32>
    %15 = tpu.matmul %13, %14, %cst_9 {dimension_numbers = #tpu.dot_dimension_numbers<[1], [0], [0], [1], [0, 0, 1, 1], [], []>} : vector<8x32xf32>, vector<32x32xf32>, vector<8x32xf32> -> vector<8x32xf32>
    %c0_10 = arith.constant 0 : index
    %c0_11 = arith.constant 0 : index
    %16 = vector.load %arg4[%c0_10, %c0_11] : memref<1x32xf32, #tpu.memory_space<vmem>>, vector<1x32xf32>
    %17 = vector.broadcast %16 : vector<1x32xf32> to vector<8x32xf32>
    %18 = arith.addf %15, %17 : vector<8x32xf32>
    %cst_12 = arith.constant dense<0.000000e+00> : vector<32xf32>
    %19 = vector.multi_reduction <add>, %18, %cst_12 [0] : vector<8x32xf32> to vector<32xf32>
    %20 = vector.shape_cast %19 : vector<32xf32> to vector<1x32xf32>
    %cst_13 = arith.constant 8.000000e+00 : f32
    %21 = vector.broadcast %cst_13 : f32 to vector<1x32xf32>
    %22 = arith.divf %20, %21 : vector<1x32xf32>
    %23 = arith.mulf %18, %18 : vector<8x32xf32>
    %cst_14 = arith.constant dense<0.000000e+00> : vector<32xf32>
    %24 = vector.multi_reduction <add>, %23, %cst_14 [0] : vector<8x32xf32> to vector<32xf32>
    %25 = vector.shape_cast %24 : vector<32xf32> to vector<1x32xf32>
    %cst_15 = arith.constant 8.000000e+00 : f32
    %26 = vector.broadcast %cst_15 : f32 to vector<1x32xf32>
    %27 = arith.divf %25, %26 : vector<1x32xf32>
    %28 = arith.mulf %22, %22 : vector<1x32xf32>
    %29 = arith.subf %27, %28 : vector<1x32xf32>
    %cst_16 = arith.constant 0.000000e+00 : f32
    %30 = vector.broadcast %cst_16 : f32 to vector<1x32xf32>
    %31 = arith.maximumf %29, %30 : vector<1x32xf32>
    %32 = vector.broadcast %22 : vector<1x32xf32> to vector<8x32xf32>
    %33 = arith.subf %18, %32 : vector<8x32xf32>
    %cst_17 = arith.constant 9.99999974E-6 : f32
    %34 = vector.broadcast %cst_17 : f32 to vector<1x32xf32>
    %35 = arith.addf %31, %34 : vector<1x32xf32>
    %36 = math.rsqrt %35 : vector<1x32xf32>
    %37 = vector.broadcast %36 : vector<1x32xf32> to vector<8x32xf32>
    %38 = arith.mulf %33, %37 : vector<8x32xf32>
    %c0_18 = arith.constant 0 : index
    %c0_19 = arith.constant 0 : index
    %39 = vector.load %arg5[%c0_18, %c0_19] : memref<1x32xf32, #tpu.memory_space<vmem>>, vector<1x32xf32>
    %40 = vector.broadcast %39 : vector<1x32xf32> to vector<8x32xf32>
    %41 = arith.mulf %38, %40 : vector<8x32xf32>
    %c0_20 = arith.constant 0 : index
    %c0_21 = arith.constant 0 : index
    %42 = vector.load %arg6[%c0_20, %c0_21] : memref<1x32xf32, #tpu.memory_space<vmem>>, vector<1x32xf32>
    %43 = vector.broadcast %42 : vector<1x32xf32> to vector<8x32xf32>
    %44 = arith.addf %41, %43 : vector<8x32xf32>
    %cst_22 = arith.constant 0.000000e+00 : f32
    %45 = vector.broadcast %cst_22 : f32 to vector<8x32xf32>
    %46 = arith.maximumf %44, %45 : vector<8x32xf32>
    %47 = math.absf %44 : vector<8x32xf32>
    %cst_23 = arith.constant 0.000000e+00 : f32
    %48 = vector.broadcast %cst_23 : f32 to vector<8x32xf32>
    %49 = arith.subf %48, %47 : vector<8x32xf32>
    %50 = math.exp %49 : vector<8x32xf32>
    %51 = math.log1p %50 : vector<8x32xf32>
    %52 = arith.addf %46, %51 : vector<8x32xf32>
    %cst_24 = arith.constant 0.000000e+00 : f32
    %53 = vector.broadcast %cst_24 : f32 to vector<8x32xf32>
    %54 = arith.maximumf %52, %53 : vector<8x32xf32>
    %55 = math.absf %52 : vector<8x32xf32>
    %cst_25 = arith.constant 0.000000e+00 : f32
    %56 = vector.broadcast %cst_25 : f32 to vector<8x32xf32>
    %57 = arith.subf %56, %55 : vector<8x32xf32>
    %58 = math.exp %57 : vector<8x32xf32>
    %59 = math.log1p %58 : vector<8x32xf32>
    %60 = arith.addf %54, %59 : vector<8x32xf32>
    %c0_26 = arith.constant 0 : index
    %c0_27 = arith.constant 0 : index
    %61 = vector.load %arg7[%c0_26, %c0_27] : memref<32x8xf32, #tpu.memory_space<vmem>>, vector<32x8xf32>
    %cst_28 = arith.constant dense<0.000000e+00> : vector<8x8xf32>
    %62 = tpu.matmul %60, %61, %cst_28 {dimension_numbers = #tpu.dot_dimension_numbers<[1], [0], [0], [1], [0, 0, 1, 1], [], []>} : vector<8x32xf32>, vector<32x8xf32>, vector<8x8xf32> -> vector<8x8xf32>
    %c0_29 = arith.constant 0 : index
    %c0_30 = arith.constant 0 : index
    %63 = vector.load %arg8[%c0_29, %c0_30] : memref<1x8xf32, #tpu.memory_space<vmem>>, vector<1x8xf32>
    %64 = vector.broadcast %63 : vector<1x8xf32> to vector<8x8xf32>
    %65 = arith.addf %62, %64 : vector<8x8xf32>
    %c0_31 = arith.constant 0 : index
    %c0_32 = arith.constant 0 : index
    %66 = vector.load %arg11[%c0_31, %c0_32] : memref<8x8xf32, #tpu.memory_space<vmem>>, vector<8x8xf32>
    tpu.vector_store %arg11[%c0_31, %c0_32], %65 {strides = array<i32>} : memref<8x8xf32, #tpu.memory_space<vmem>>, vector<8x8xf32>,
    %c0_33 = arith.constant 0 : index
    %c0_34 = arith.constant 0 : index
    %67 = vector.load %arg9[%c0_33, %c0_34] : memref<32x8xf32, #tpu.memory_space<vmem>>, vector<32x8xf32>
    %cst_35 = arith.constant dense<0.000000e+00> : vector<8x8xf32>
    %68 = tpu.matmul %60, %67, %cst_35 {dimension_numbers = #tpu.dot_dimension_numbers<[1], [0], [0], [1], [0, 0, 1, 1], [], []>} : vector<8x32xf32>, vector<32x8xf32>, vector<8x8xf32> -> vector<8x8xf32>
    %c0_36 = arith.constant 0 : index
    %c0_37 = arith.constant 0 : index
    %69 = vector.load %arg10[%c0_36, %c0_37] : memref<1x8xf32, #tpu.memory_space<vmem>>, vector<1x8xf32>
    %70 = vector.broadcast %69 : vector<1x8xf32> to vector<8x8xf32>
    %71 = arith.addf %68, %70 : vector<8x8xf32>
    %72 = math.exp %71 : vector<8x8xf32>
    %c0_38 = arith.constant 0 : index
    %c0_39 = arith.constant 0 : index
    %73 = vector.load %arg12[%c0_38, %c0_39] : memref<8x8xf32, #tpu.memory_space<vmem>>, vector<8x8xf32>
    tpu.vector_store %arg12[%c0_38, %c0_39], %72 {strides = array<i32>} : memref<8x8xf32, #tpu.memory_space<vmem>>, vector<8x8xf32>,
    return
  }
}

</mosaic_0001>

<llo_original>
// kernel: tpu_custom_call.1
$region0: #{tpu_custom_call.1}
  #allocation0 [shape = 'u32[]', space=smem, size = 0x4, offset = 0x4, fixed_abs, tag = 'smem constant byte address 0x4 - core index']
  #allocation1 [shape = 'u32[144,128]{1,0:T(1,128)}', space=vmem, size = 0x12000, scoped, tag = 'internal scratch']
  %s0 = inlined_call_operand.vmem [shape: f32[8,16], index: 0, kind: input, shape index: {}]
  %s1 = inlined_call_operand.vmem [shape: f32[16,32], index: 1, kind: input, shape index: {}]
  %s2 = inlined_call_operand.vmem [shape: f32[1,32], index: 2, kind: input, shape index: {}]
  %s3 = inlined_call_operand.vmem [shape: f32[32,32], index: 3, kind: input, shape index: {}]
  %s4 = inlined_call_operand.vmem [shape: f32[1,32], index: 4, kind: input, shape index: {}]
  %s5 = inlined_call_operand.vmem [shape: f32[1,32], index: 5, kind: input, shape index: {}]
  %s6 = inlined_call_operand.vmem [shape: f32[1,32], index: 6, kind: input, shape index: {}]
  %s7 = inlined_call_operand.vmem [shape: f32[32,8], index: 7, kind: input, shape index: {}]
  %s8 = inlined_call_operand.vmem [shape: f32[1,8], index: 8, kind: input, shape index: {}]
  %s9 = inlined_call_operand.vmem [shape: f32[32,8], index: 9, kind: input, shape index: {}]
  %s10 = inlined_call_operand.vmem [shape: f32[1,8], index: 10, kind: input, shape index: {}]
  %s11 = inlined_call_operand.hbm [shape: f32[8,8], index: 11, kind: output, shape index: {0}]
  %s12 = inlined_call_operand.hbm [shape: f32[8,8], index: 12, kind: output, shape index: {1}]
  %13 = xla_tuple %s11, %s12
  %s14 = sld [smem:[#allocation0]]
  $region62: #{tpu_custom_call.1} parent=0
    _
  %s16 = ssub.s32 1, %s14
  %s17 = scalar_select 0, %s16, %s14
  $region1: #{tpu_custom_call.1} parent=0
    #allocation2 [shape = 'u8[4096]{0}', space=vmem, size = 0x1000, scoped, tag = 'output window, operand 0, single buffered']
    #allocation3 [shape = 's32[1]{0}', space=sflag, size = 0x4, scoped, tag = 'scoped memory for tpu_custom_call.1']
    #allocation4 [shape = 'u8[4096]{0}', space=vmem, size = 0x1000, scoped, tag = 'output window, operand 1, single buffered']
    #allocation5 [shape = 's32[1]{0}', space=sflag, size = 0x4, scoped, tag = 'scoped memory for tpu_custom_call.1']
    %18 = vsyncpa [#allocation3], 0
    %19 = vsyncpa [#allocation5], 0
    // Predicated region
    $region2: #{tpu_custom_call.1} parent=1 // pred_check
      _
    $region3: #{tpu_custom_call.1} parent=1 // pred_check_branch
      %21 = sbr.rel (0) target = $region5
    $region4: #{tpu_custom_call.1} parent=1 // pred_region
      _
    $region5: #{tpu_custom_call.1} parent=1 // pred_fallthru
      _
    // Predicated region
    $region6: #{tpu_custom_call.1} parent=1 // pred_check
      _
    $region7: #{tpu_custom_call.1} parent=1 // pred_check_branch
      %23 = sbr.rel (0) target = $region9
    $region8: #{tpu_custom_call.1} parent=1 // pred_region
      _
    $region9: #{tpu_custom_call.1} parent=1 // pred_fallthru
      _
    // Predicated region
    $region10: #{tpu_custom_call.1} parent=1 // pred_check
      _
    $region11: #{tpu_custom_call.1} parent=1 // pred_check_branch
      %25 = sbr.rel (0) target = $region13
    $region12: #{tpu_custom_call.1} parent=1 // pred_region
      _
    $region13: #{tpu_custom_call.1} parent=1 // pred_fallthru
      _
    // Predicated region
    $region14: #{tpu_custom_call.1} parent=1 // pred_check
      _
    $region15: #{tpu_custom_call.1} parent=1 // pred_check_branch
      %27 = sbr.rel (0) target = $region17
    $region16: #{tpu_custom_call.1} parent=1 // pred_region
      _
    $region17: #{tpu_custom_call.1} parent=1 // pred_fallthru
      _
    // Predicated region
    $region18: #{tpu_custom_call.1} parent=1 // pred_check
      _
    $region19: #{tpu_custom_call.1} parent=1 // pred_check_branch
      %29 = sbr.rel (0) target = $region21
    $region20: #{tpu_custom_call.1} parent=1 // pred_region
      _
    $region21: #{tpu_custom_call.1} parent=1 // pred_fallthru
      _
    // Predicated region
    $region22: #{tpu_custom_call.1} parent=1 // pred_check
      _
    $region23: #{tpu_custom_call.1} parent=1 // pred_check_branch
      %31 = sbr.rel (0) target = $region25
    $region24: #{tpu_custom_call.1} parent=1 // pred_region
      _
    $region25: #{tpu_custom_call.1} parent=1 // pred_fallthru
      _
    // Predicated region
    $region26: #{tpu_custom_call.1} parent=1 // pred_check
      _
    $region27: #{tpu_custom_call.1} parent=1 // pred_check_branch
      %33 = sbr.rel (0) target = $region29
    $region28: #{tpu_custom_call.1} parent=1 // pred_region
      _
    $region29: #{tpu_custom_call.1} parent=1 // pred_fallthru
      _
    // Predicated region
    $region30: #{tpu_custom_call.1} parent=1 // pred_check
      _
    $region31: #{tpu_custom_call.1} parent=1 // pred_check_branch
      %35 = sbr.rel (0) target = $region33
    $region32: #{tpu_custom_call.1} parent=1 // pred_region
      _
    $region33: #{tpu_custom_call.1} parent=1 // pred_fallthru
      _
    // Predicated region
    $region34: #{tpu_custom_call.1} parent=1 // pred_check
      _
    $region35: #{tpu_custom_call.1} parent=1 // pred_check_branch
      %37 = sbr.rel (0) target = $region37
    $region36: #{tpu_custom_call.1} parent=1 // pred_region
      _
    $region37: #{tpu_custom_call.1} parent=1 // pred_fallthru
      _
    // Predicated region
    $region38: #{tpu_custom_call.1} parent=1 // pred_check
      _
    $region39: #{tpu_custom_call.1} parent=1 // pred_check_branch
      %39 = sbr.rel (0) target = $region41
    $region40: #{tpu_custom_call.1} parent=1 // pred_region
      _
    $region41: #{tpu_custom_call.1} parent=1 // pred_fallthru
      _
    // Predicated region
    $region42: #{tpu_custom_call.1} parent=1 // pred_check
      _
    $region43: #{tpu_custom_call.1} parent=1 // pred_check_branch
      %41 = sbr.rel (0) target = $region45
    $region44: #{tpu_custom_call.1} parent=1 // pred_region
      _
    $region45: #{tpu_custom_call.1} parent=1 // pred_fallthru
      _
    %v42 = vld [vmem:[%s0] sm:$0xff]
    %v43 = vld [vmem:[%s1] sm:$0xff]
    %v44 = vld [vmem:[%s1 + $0x8] sm:$0xff]
    %v45 = vld [vmem:[%s2] sm:$0x1]
    %v47 = vlaneseq
    %v48 = vshrl.u32 %v47, 7
    %v49 = vsub.s32 0, %v48
    %v50 = vrot.slane %v45, %v49
    %vm52 = vcmask 130048
    %v54 = vsel %vm52, %v42, 0
    %56 = vmatprep.subr.mxu0 0.0
    %57 = vmatpush1.msra.mxu0 0.0
    %58 = vmatprep.subr.mxu0 0.0
    %59 = vmatpush1.msra.mxu0 0.0
    %60 = vmatprep.subr.mxu0 0.0
    %61 = vmatpush1.msra.mxu0 0.0
    %62 = vmatprep.subr.mxu0 0.0
    %63 = vmatpush1.msra.mxu0 0.0
    %64 = vmatprep.subr.mxu0 0.0
    %65 = vmatpush1.msra.mxu0 0.0
    %66 = vmatprep.subr.mxu0 0.0
    %67 = vmatpush1.msra.mxu0 0.0
    %68 = vmatprep.subr.mxu0 0.0
    %69 = vmatpush1.msra.mxu0 0.0
    %70 = vmatprep.subr.mxu0 0.0
    %71 = vmatpush1.msra.mxu0 0.0
    %72 = vmatprep.subr.mxu0 0.0
    %73 = vmatpush1.msra.mxu0 0.0
    %74 = vmatprep.subr.mxu0 0.0
    %75 = vmatpush1.msra.mxu0 0.0
    %76 = vmatprep.subr.mxu0 0.0
    %77 = vmatpush1.msra.mxu0 0.0
    %78 = vmatprep.subr.mxu0 0.0
    %79 = vmatpush1.msra.mxu0 0.0
    %80 = vmatprep.subr.mxu0 0.0
    %81 = vmatpush1.msra.mxu0 0.0
    %82 = vmatprep.subr.mxu0 0.0
    %83 = vmatpush1.msra.mxu0 0.0
    %84 = vmatprep.subr.mxu0 0.0
    %85 = vmatpush1.msra.mxu0 %v44
    %86 = vmatprep.subr.mxu0 0.0
    %87 = vmatpush1.msra.mxu0 %v43
    %88 = vmatprep.subr.mxu0 0.0
    %89 = vmatpush2.msra.mxu0 0.0
    %90 = vmatprep.subr.mxu0 0.0
    %91 = vmatpush2.msra.mxu0 0.0
    %92 = vmatprep.subr.mxu0 0.0
    %93 = vmatpush2.msra.mxu0 0.0
    %94 = vmatprep.subr.mxu0 0.0
    %95 = vmatpush2.msra.mxu0 0.0
    %96 = vmatprep.subr.mxu0 0.0
    %97 = vmatpush2.msra.mxu0 0.0
    %98 = vmatprep.subr.mxu0 0.0
    %99 = vmatpush2.msra.mxu0 0.0
    %100 = vmatprep.subr.mxu0 0.0
    %101 = vmatpush2.msra.mxu0 0.0
    %102 = vmatprep.subr.mxu0 0.0
    %103 = vmatpush2.msra.mxu0 0.0
    %104 = vmatprep.subr.mxu0 0.0
    %105 = vmatpush2.msra.mxu0 0.0
    %106 = vmatprep.subr.mxu0 0.0
    %107 = vmatpush2.msra.mxu0 0.0
    %108 = vmatprep.subr.mxu0 0.0
    %109 = vmatpush2.msra.mxu0 0.0
    %110 = vmatprep.subr.mxu0 0.0
    %111 = vmatpush2.msra.mxu0 0.0
    %112 = vmatprep.subr.mxu0 0.0
    %113 = vmatpush2.msra.mxu0 0.0
    %114 = vmatprep.subr.mxu0 0.0
    %115 = vmatpush2.msra.mxu0 0.0
    %116 = vmatprep.subr.mxu0 0.0
    %117 = vmatpush2.msra.mxu0 0.0
    %118 = vmatprep.subr.mxu0 0.0
    %119 = vmatpush2.msra.mxu0 0.0
    %120 = vmatprep.mubr.f32.mxu0 0.0
    %121 = vmatmul.mubr.f32.gmra.mxu0 %v54
    %v122 = vpop.f32.mrf.mxu0
    %v123 = vadd.f32 %v50, %v122
    %v124 = vpop.f32.mrf.mxu0
    %125 = vdwg.mxu0
    %v126 = vmax.f32 %v123, 0.0
    %v127 = vand.u32 2147483647, %v123
    %v128 = vsub.f32 0.0, %v127
    %v129 = vmul.f32 %v128, 1.442695
    %v130 = vpow.pop %v129
    %v131 = vadd.f32 %v130, 1.0
    %v132 = vlog2.pop %v131
    %v133 = vmul.f32 %v132, 0.6931472
    %v134 = vmul.f32 -0.5, %v130
    %v135 = vadd.f32 %v134, 1.0
    %v136 = vmul.f32 %v135, %v130
    %v137 = vand.u32 2147483647, %v130
    %vm138 = vcmp.lt.f32.partialorder %v137, 0.0004427343
    %v139 = vsel %vm138, %v136, %v133
    %v140 = vadd.f32 %v126, %v139
    %v141 = vld [vmem:[%s3] sm:$0xff]
    %v142 = vld [vmem:[%s3 + $0x8] sm:$0xff]
    %v143 = vld [vmem:[%s3 + $0x10] sm:$0xff]
    %v144 = vld [vmem:[%s3 + $0x18] sm:$0xff]
    %v145 = vld [vmem:[%s4] sm:$0x1]
    %v147 = vlaneseq
    %v148 = vshrl.u32 %v147, 7
    %v149 = vsub.s32 0, %v148
    %v150 = vrot.slane %v145, %v149
    %vm152 = vcmask 261120
    %v154 = vsel %vm152, %v140, 0
    %156 = vmatprep.subr.mxu0 0.0
    %157 = vmatpush1.msra.mxu0 0.0
    %158 = vmatprep.subr.mxu0 0.0
    %159 = vmatpush1.msra.mxu0 0.0
    %160 = vmatprep.subr.mxu0 0.0
    %161 = vmatpush1.msra.mxu0 0.0
    %162 = vmatprep.subr.mxu0 0.0
    %163 = vmatpush1.msra.mxu0 0.0
    %164 = vmatprep.subr.mxu0 0.0
    %165 = vmatpush1.msra.mxu0 0.0
    %166 = vmatprep.subr.mxu0 0.0
    %167 = vmatpush1.msra.mxu0 0.0
    %168 = vmatprep.subr.mxu0 0.0
    %169 = vmatpush1.msra.mxu0 0.0
    %170 = vmatprep.subr.mxu0 0.0
    %171 = vmatpush1.msra.mxu0 0.0
    %172 = vmatprep.subr.mxu0 0.0
    %173 = vmatpush1.msra.mxu0 0.0
    %174 = vmatprep.subr.mxu0 0.0
    %175 = vmatpush1.msra.mxu0 0.0
    %176 = vmatprep.subr.mxu0 0.0
    %177 = vmatpush1.msra.mxu0 0.0
    %178 = vmatprep.subr.mxu0 0.0
    %179 = vmatpush1.msra.mxu0 0.0
    %180 = vmatprep.subr.mxu0 0.0
    %181 = vmatpush1.msra.mxu0 %v144
    %182 = vmatprep.subr.mxu0 0.0
    %183 = vmatpush1.msra.mxu0 %v143
    %184 = vmatprep.subr.mxu0 0.0
    %185 = vmatpush1.msra.mxu0 %v142
    %186 = vmatprep.subr.mxu0 0.0
    %187 = vmatpush1.msra.mxu0 %v141
    %188 = vmatprep.subr.mxu0 0.0
    %189 = vmatpush2.msra.mxu0 0.0
    %190 = vmatprep.subr.mxu0 0.0
    %191 = vmatpush2.msra.mxu0 0.0
    %192 = vmatprep.subr.mxu0 0.0
    %193 = vmatpush2.msra.mxu0 0.0
    %194 = vmatprep.subr.mxu0 0.0
    %195 = vmatpush2.msra.mxu0 0.0
    %196 = vmatprep.subr.mxu0 0.0
    %197 = vmatpush2.msra.mxu0 0.0
    %198 = vmatprep.subr.mxu0 0.0
    %199 = vmatpush2.msra.mxu0 0.0
    %200 = vmatprep.subr.mxu0 0.0
    %201 = vmatpush2.msra.mxu0 0.0
    %202 = vmatprep.subr.mxu0 0.0
    %203 = vmatpush2.msra.mxu0 0.0
    %204 = vmatprep.subr.mxu0 0.0
    %205 = vmatpush2.msra.mxu0 0.0
    %206 = vmatprep.subr.mxu0 0.0
    %207 = vmatpush2.msra.mxu0 0.0
    %208 = vmatprep.subr.mxu0 0.0
    %209 = vmatpush2.msra.mxu0 0.0
    %210 = vmatprep.subr.mxu0 0.0
    %211 = vmatpush2.msra.mxu0 0.0
    %212 = vmatprep.subr.mxu0 0.0
    %213 = vmatpush2.msra.mxu0 0.0
    %214 = vmatprep.subr.mxu0 0.0
    %215 = vmatpush2.msra.mxu0 0.0
    %216 = vmatprep.subr.mxu0 0.0
    %217 = vmatpush2.msra.mxu0 0.0
    %218 = vmatprep.subr.mxu0 0.0
    %219 = vmatpush2.msra.mxu0 0.0
    %220 = vmatprep.mubr.f32.mxu0 0.0
    %221 = vmatmul.mubr.f32.gmra.mxu0 %v154
    %v222 = vpop.f32.mrf.mxu0
    %v223 = vadd.f32 %v150, %v222
    %v224 = vpop.f32.mrf.mxu0
    %225 = vdwg.mxu0
    %v226 = vsel %vm152, %v223, 0.0
    %v227 = vrot.slane %v226, 4
    %v228 = vadd.f32 %v226, %v227
    %v229 = vrot.slane %v228, 2
    %v230 = vadd.f32 %v228, %v229
    %v231 = vrot.slane %v230, 1
    %v232 = vadd.f32 %v230, %v231
    %v233 = vrcp.pop 8.0
    %v234 = vmul.f32 %v232, %v233
    %v235 = vmul.f32 %v223, %v223
    %v236 = vsel %vm152, %v235, 0.0
    %v237 = vrot.slane %v236, 4
    %v238 = vadd.f32 %v236, %v237
    %v239 = vrot.slane %v238, 2
    %v240 = vadd.f32 %v238, %v239
    %v241 = vrot.slane %v240, 1
    %v242 = vadd.f32 %v240, %v241
    %v243 = vmul.f32 %v242, %v233
    %v244 = vmul.f32 %v234, %v234
    %v245 = vsub.f32 %v243, %v244
    %v246 = vmax.f32 %v245, 0.0
    %v247 = vsub.f32 %v223, %v234
    %v248 = vadd.f32 %v246, 1e-05
    %v249 = vrsqrt.pop %v248
    %v250 = vmul.f32 %v247, %v249
    %v251 = vld [vmem:[%s5] sm:$0x1]
    %v253 = vlaneseq
    %v254 = vshrl.u32 %v253, 7
    %v255 = vsub.s32 0, %v254
    %v256 = vrot.slane %v251, %v255
    %v258 = vmul.f32 %v250, %v256
    %v259 = vld [vmem:[%s6] sm:$0x1]
    %v261 = vlaneseq
    %v262 = vshrl.u32 %v261, 7
    %v263 = vsub.s32 0, %v262
    %v264 = vrot.slane %v259, %v263
    %v266 = vadd.f32 %v258, %v264
    %v267 = vmax.f32 %v266, 0.0
    %v268 = vand.u32 2147483647, %v266
    %v269 = vsub.f32 0.0, %v268
    %v270 = vmul.f32 %v269, 1.442695
    %v271 = vpow.pop %v270
    %v272 = vadd.f32 %v271, 1.0
    %v273 = vlog2.pop %v272
    %v274 = vmul.f32 %v273, 0.6931472
    %v275 = vmul.f32 -0.5, %v271
    %v276 = vadd.f32 %v275, 1.0
    %v277 = vmul.f32 %v276, %v271
    %v278 = vand.u32 2147483647, %v271
    %vm279 = vcmp.lt.f32.partialorder %v278, 0.0004427343
    %v280 = vsel %vm279, %v277, %v274
    %v281 = vadd.f32 %v267, %v280
    %v282 = vmax.f32 %v281, 0.0
    %v283 = vand.u32 2147483647, %v281
    %v284 = vsub.f32 0.0, %v283
    %v285 = vmul.f32 %v284, 1.442695
    %v286 = vpow.pop %v285
    %v287 = vadd.f32 %v286, 1.0
    %v288 = vlog2.pop %v287
    %v289 = vmul.f32 %v288, 0.6931472
    %v290 = vmul.f32 -0.5, %v286
    %v291 = vadd.f32 %v290, 1.0
    %v292 = vmul.f32 %v291, %v286
    %v293 = vand.u32 2147483647, %v286
    %vm294 = vcmp.lt.f32.partialorder %v293, 0.0004427343
    %v295 = vsel %vm294, %v292, %v289
    %v296 = vadd.f32 %v282, %v295
    %v297 = vld [vmem:[%s7] sm:$0xff]
    %v298 = vld [vmem:[%s7 + $0x8] sm:$0xff]
    %v299 = vld [vmem:[%s7 + $0x10] sm:$0xff]
    %v300 = vld [vmem:[%s7 + $0x18] sm:$0xff]
    %v301 = vld [vmem:[%s8] sm:$0x1]
    %v303 = vlaneseq
    %v304 = vshrl.u32 %v303, 7
    %v305 = vsub.s32 0, %v304
    %v306 = vrot.slane %v301, %v305
    %v309 = vsel %vm152, %v296, 0
    %311 = vmatprep.subr.mxu0 0.0
    %312 = vmatpush1.msra.mxu0 0.0
    %313 = vmatprep.subr.mxu0 0.0
    %314 = vmatpush1.msra.mxu0 0.0
    %315 = vmatprep.subr.mxu0 0.0
    %316 = vmatpush1.msra.mxu0 0.0
    %317 = vmatprep.subr.mxu0 0.0
    %318 = vmatpush1.msra.mxu0 0.0
    %319 = vmatprep.subr.mxu0 0.0
    %320 = vmatpush1.msra.mxu0 0.0
    %321 = vmatprep.subr.mxu0 0.0
    %322 = vmatpush1.msra.mxu0 0.0
    %323 = vmatprep.subr.mxu0 0.0
    %324 = vmatpush1.msra.mxu0 0.0
    %325 = vmatprep.subr.mxu0 0.0
    %326 = vmatpush1.msra.mxu0 0.0
    %327 = vmatprep.subr.mxu0 0.0
    %328 = vmatpush1.msra.mxu0 0.0
    %329 = vmatprep.subr.mxu0 0.0
    %330 = vmatpush1.msra.mxu0 0.0
    %331 = vmatprep.subr.mxu0 0.0
    %332 = vmatpush1.msra.mxu0 0.0
    %333 = vmatprep.subr.mxu0 0.0
    %334 = vmatpush1.msra.mxu0 0.0
    %335 = vmatprep.subr.mxu0 0.0
    %336 = vmatpush1.msra.mxu0 %v300
    %337 = vmatprep.subr.mxu0 0.0
    %338 = vmatpush1.msra.mxu0 %v299
    %339 = vmatprep.subr.mxu0 0.0
    %340 = vmatpush1.msra.mxu0 %v298
    %341 = vmatprep.subr.mxu0 0.0
    %342 = vmatpush1.msra.mxu0 %v297
    %343 = vmatprep.subr.mxu0 0.0
    %344 = vmatpush2.msra.mxu0 0.0
    %345 = vmatprep.subr.mxu0 0.0
    %346 = vmatpush2.msra.mxu0 0.0
    %347 = vmatprep.subr.mxu0 0.0
    %348 = vmatpush2.msra.mxu0 0.0
    %349 = vmatprep.subr.mxu0 0.0
    %350 = vmatpush2.msra.mxu0 0.0
    %351 = vmatprep.subr.mxu0 0.0
    %352 = vmatpush2.msra.mxu0 0.0
    %353 = vmatprep.subr.mxu0 0.0
    %354 = vmatpush2.msra.mxu0 0.0
    %355 = vmatprep.subr.mxu0 0.0
    %356 = vmatpush2.msra.mxu0 0.0
    %357 = vmatprep.subr.mxu0 0.0
    %358 = vmatpush2.msra.mxu0 0.0
    %359 = vmatprep.subr.mxu0 0.0
    %360 = vmatpush2.msra.mxu0 0.0
    %361 = vmatprep.subr.mxu0 0.0
    %362 = vmatpush2.msra.mxu0 0.0
    %363 = vmatprep.subr.mxu0 0.0
    %364 = vmatpush2.msra.mxu0 0.0
    %365 = vmatprep.subr.mxu0 0.0
    %366 = vmatpush2.msra.mxu0 0.0
    %367 = vmatprep.subr.mxu0 0.0
    %368 = vmatpush2.msra.mxu0 0.0
    %369 = vmatprep.subr.mxu0 0.0
    %370 = vmatpush2.msra.mxu0 0.0
    %371 = vmatprep.subr.mxu0 0.0
    %372 = vmatpush2.msra.mxu0 0.0
    %373 = vmatprep.subr.mxu0 0.0
    %374 = vmatpush2.msra.mxu0 0.0
    %375 = vmatprep.mubr.f32.mxu0 0.0
    %376 = vmatmul.mubr.f32.gmra.mxu0 %v309
    %v377 = vpop.f32.mrf.mxu0
    %v378 = vadd.f32 %v306, %v377
    %v379 = vpop.f32.mrf.mxu0
    %380 = vdwg.mxu0
    %vm381 = vcmask 64512
    %382 = vst.msk [vmem:[#allocation2] sm:$0xff] %vm381, %v378
    %v383 = vld [vmem:[%s9] sm:$0xff]
    %v384 = vld [vmem:[%s9 + $0x8] sm:$0xff]
    %v385 = vld [vmem:[%s9 + $0x10] sm:$0xff]
    %v386 = vld [vmem:[%s9 + $0x18] sm:$0xff]
    %v387 = vld [vmem:[%s10] sm:$0x1]
    %v389 = vlaneseq
    %v390 = vshrl.u32 %v389, 7
    %v391 = vsub.s32 0, %v390
    %v392 = vrot.slane %v387, %v391
    %394 = vmatprep.subr.mxu0 0.0
    %395 = vmatpush1.msra.mxu0 0.0
    %396 = vmatprep.subr.mxu0 0.0
    %397 = vmatpush1.msra.mxu0 0.0
    %398 = vmatprep.subr.mxu0 0.0
    %399 = vmatpush1.msra.mxu0 0.0
    %400 = vmatprep.subr.mxu0 0.0
    %401 = vmatpush1.msra.mxu0 0.0
    %402 = vmatprep.subr.mxu0 0.0
    %403 = vmatpush1.msra.mxu0 0.0
    %404 = vmatprep.subr.mxu0 0.0
    %405 = vmatpush1.msra.mxu0 0.0
    %406 = vmatprep.subr.mxu0 0.0
    %407 = vmatpush1.msra.mxu0 0.0
    %408 = vmatprep.subr.mxu0 0.0
    %409 = vmatpush1.msra.mxu0 0.0
    %410 = vmatprep.subr.mxu0 0.0
    %411 = vmatpush1.msra.mxu0 0.0
    %412 = vmatprep.subr.mxu0 0.0
    %413 = vmatpush1.msra.mxu0 0.0
    %414 = vmatprep.subr.mxu0 0.0
    %415 = vmatpush1.msra.mxu0 0.0
    %416 = vmatprep.subr.mxu0 0.0
    %417 = vmatpush1.msra.mxu0 0.0
    %418 = vmatprep.subr.mxu0 0.0
    %419 = vmatpush1.msra.mxu0 %v386
    %420 = vmatprep.subr.mxu0 0.0
    %421 = vmatpush1.msra.mxu0 %v385
    %422 = vmatprep.subr.mxu0 0.0
    %423 = vmatpush1.msra.mxu0 %v384
    %424 = vmatprep.subr.mxu0 0.0
    %425 = vmatpush1.msra.mxu0 %v383
    %426 = vmatprep.subr.mxu0 0.0
    %427 = vmatpush2.msra.mxu0 0.0
    %428 = vmatprep.subr.mxu0 0.0
    %429 = vmatpush2.msra.mxu0 0.0
    %430 = vmatprep.subr.mxu0 0.0
    %431 = vmatpush2.msra.mxu0 0.0
    %432 = vmatprep.subr.mxu0 0.0
    %433 = vmatpush2.msra.mxu0 0.0
    %434 = vmatprep.subr.mxu0 0.0
    %435 = vmatpush2.msra.mxu0 0.0
    %436 = vmatprep.subr.mxu0 0.0
    %437 = vmatpush2.msra.mxu0 0.0
    %438 = vmatprep.subr.mxu0 0.0
    %439 = vmatpush2.msra.mxu0 0.0
    %440 = vmatprep.subr.mxu0 0.0
    %441 = vmatpush2.msra.mxu0 0.0
    %442 = vmatprep.subr.mxu0 0.0
    %443 = vmatpush2.msra.mxu0 0.0
    %444 = vmatprep.subr.mxu0 0.0
    %445 = vmatpush2.msra.mxu0 0.0
    %446 = vmatprep.subr.mxu0 0.0
    %447 = vmatpush2.msra.mxu0 0.0
    %448 = vmatprep.subr.mxu0 0.0
    %449 = vmatpush2.msra.mxu0 0.0
    %450 = vmatprep.subr.mxu0 0.0
    %451 = vmatpush2.msra.mxu0 0.0
    %452 = vmatprep.subr.mxu0 0.0
    %453 = vmatpush2.msra.mxu0 0.0
    %454 = vmatprep.subr.mxu0 0.0
    %455 = vmatpush2.msra.mxu0 0.0
    %456 = vmatprep.subr.mxu0 0.0
    %457 = vmatpush2.msra.mxu0 0.0
    %458 = vmatprep.mubr.f32.mxu0 0.0
    %459 = vmatmul.mubr.f32.gmra.mxu0 %v309
    %v460 = vpop.f32.mrf.mxu0
    %v461 = vadd.f32 %v392, %v460
    %v462 = vpop.f32.mrf.mxu0
    %463 = vdwg.mxu0
    %v464 = vmul.f32 %v461, 1.442695
    %v465 = vpow.pop %v464
    %466 = vst.msk [vmem:[#allocation4] sm:$0xff] %vm381, %v465
    // Predicated region
    $region46: #{tpu_custom_call.1} parent=1 // pred_check
      _
    $region47: #{tpu_custom_call.1} parent=1 // pred_check_branch
      %468 = sbr.rel (0) target = $region49
    $region48: #{tpu_custom_call.1} parent=1 // pred_region
      %s470 = ssub.s32 128, 128
      %471 = vsyncadd [#allocation3], %s470
      %s473 = sshll.u32 [#allocation2], 4
      %s474 = int_to_ptr.vmem [resolvable:$true] %s473
      %476 = dma.vmem_to_hbm [thread:$0]  %s474, 128, %s11, [#allocation3]
    $region49: #{tpu_custom_call.1} parent=1 // pred_fallthru
      _
    // Predicated region
    $region50: #{tpu_custom_call.1} parent=1 // pred_check
      _
    $region51: #{tpu_custom_call.1} parent=1 // pred_check_branch
      %478 = sbr.rel (0) target = $region53
    $region52: #{tpu_custom_call.1} parent=1 // pred_region
      %s480 = ssub.s32 128, 128
      %481 = vsyncadd [#allocation5], %s480
      %s483 = sshll.u32 [#allocation4], 4
      %s484 = int_to_ptr.vmem [resolvable:$true] %s483
      %486 = dma.vmem_to_hbm [thread:$0]  %s484, 128, %s12, [#allocation5]
    $region53: #{tpu_custom_call.1} parent=1 // pred_fallthru
      _
    // Predicated region
    $region54: #{tpu_custom_call.1} parent=1 // pred_check
      _
    $region55: #{tpu_custom_call.1} parent=1 // pred_check_branch
      %488 = sbr.rel (0) target = $region57
    $region56: #{tpu_custom_call.1} parent=1 // pred_region
      %489 = dma.done [#allocation3], 128
    $region57: #{tpu_custom_call.1} parent=1 // pred_fallthru
      _
    // Predicated region
    $region58: #{tpu_custom_call.1} parent=1 // pred_check
      _
    $region59: #{tpu_custom_call.1} parent=1 // pred_check_branch
      %491 = sbr.rel (0) target = $region61
    $region60: #{tpu_custom_call.1} parent=1 // pred_region
      %492 = dma.done [#allocation5], 128
    $region61: #{tpu_custom_call.1} parent=1 // pred_fallthru
      _
    %493 = vsyncpa [#allocation3], 1
    %494 = vsyncpa [#allocation5], 1

</llo_original>
